<compile_context>
chip_gen: v7x
topology: tpu7x:2x2x1
jax: 0.10.0
libtpu: 0.0.40
codegen_flags: <defaults>
</compile_context>

<pallas_src>
import jax
import jax.numpy as jnp
from jax.experimental import pallas as pl
from jax.experimental.pallas import tpu as pltpu


# ---------------------------------------------------------------------------
# Kernel body
# ---------------------------------------------------------------------------
def _sigmoid_mul_kernel(g_ref, x_ref, o_ref):
    # g_ref: [TR, 1]    x_ref / o_ref: [TR, TC]
    g = jax.nn.sigmoid(g_ref[...].astype(jnp.float32))   # EUP, in-register upcast
    x = x_ref[...].astype(jnp.float32)                   # in-register upcast
    o_ref[...] = (x * g).astype(o_ref.dtype)             # broadcast along lanes


# ---------------------------------------------------------------------------
# Tile selection (padded-VMEM aware)
# ---------------------------------------------------------------------------
_VMEM_BUDGET = 12 * 1024 * 1024   # double-buffered footprint budget (v5e-safe)


def _round_up(x, m):
    return ((x + m - 1) // m) * m


def _sublane_pack(dtype):
    # rows per sublane pack: f32 -> 8, bf16/f16 -> 16, int8/fp8 -> 32
    return {4: 8, 2: 16, 1: 32}.get(jnp.dtype(dtype).itemsize, 8)


def _padded_block_bytes(tr, tc, itemsize):
    """VMEM bytes of one grid step's blocks after lane padding:
    x block + out block (lane dim padded to 128) + gate block ((tr,1)->(tr,128))."""
    lane = _round_up(tc, 128)
    return tr * (2 * lane + 128) * itemsize


def _pick_tiles(rows, hw, dtype, target_steps=2):
    """Pick (row_tile, lane_tile). Row tile is a multiple of the dtype's
    sublane pack (or the full row extent); lane tile is full HW unless even a
    single sublane pack of full-HW rows exceeds the VMEM budget."""
    itemsize = jnp.dtype(dtype).itemsize
    sub = _sublane_pack(dtype)
    tc = hw

    if rows <= sub:
        tr = rows                                   # full-extent rows block (always legal)
    else:
        # Aim for `target_steps` grid steps (one per TensorCore on v7x).
        tr = _round_up(max(1, -(-rows // target_steps)), sub)
        # Shrink until the double-buffered, lane-padded footprint fits.
        while tr > sub and 2 * _padded_block_bytes(tr, tc, itemsize) > _VMEM_BUDGET:
            tr -= sub
        if tr >= rows:
            tr = rows                               # collapse to full extent if tiny

    # If one sublane-pack of full-HW rows is still too big, tile lanes too.
    if 2 * _padded_block_bytes(tr, tc, itemsize) > _VMEM_BUDGET:
        tc = 128
        while tc * 2 < hw and 2 * _padded_block_bytes(tr, tc * 2, itemsize) <= _VMEM_BUDGET:
            tc *= 2

    # Prefer an even number of row steps (load balance across v7x's 2 TCs).
    if tr < rows:
        grid_r = -(-rows // tr)
        if grid_r > 1 and grid_r % 2 == 1:
            tr2 = _round_up(max(1, -(-rows // (grid_r + 1))), sub)
            if tr2 >= sub and 2 * _padded_block_bytes(tr2, tc, itemsize) <= _VMEM_BUDGET:
                tr = tr2

    return tr, tc


# ---------------------------------------------------------------------------
# Wrapper
# ---------------------------------------------------------------------------
def sigmoid_mul(x_nchw, gate_nc11):
    """x_nchw: [N, C, H, W], gate_nc11: [N, C, 1, 1]  ->  [N, C, H, W]"""
    N, C, H, W = x_nchw.shape
    HW = H * W
    rows = N * C
    itemsize = jnp.dtype(x_nchw.dtype).itemsize

    # Zero-copy views (NCHW is contiguous): no transpose, no extra HBM traffic.
    x2 = x_nchw.reshape(rows, HW)
    g2 = gate_nc11.reshape(rows, 1)

    tr, tc = _pick_tiles(rows, HW, x_nchw.dtype)
    grid = (-(-rows // tr), -(-HW // tc))           # cdiv; partial last blocks masked

    footprint = 2 * _padded_block_bytes(tr, tc, itemsize)
    vmem_limit = int(min(32 * 1024 * 1024, max(2 * footprint, 16 * 1024 * 1024)))

    cost = pl.CostEstimate(
        flops=2 * rows * HW,                        # broadcast + multiply
        transcendentals=rows,                       # one sigmoid per channel
        bytes_accessed=(2 * rows * HW + rows) * itemsize,
    )

    out = pl.pallas_call(
        _sigmoid_mul_kernel,
        out_shape=jax.ShapeDtypeStruct((rows, HW), x_nchw.dtype),
        grid_spec=pltpu.PrefetchScalarGridSpec(
            num_scalar_prefetch=0,
            grid=grid,
            in_specs=[
                pl.BlockSpec((tr, 1), lambda r, c: (r, 0)),    # gate tile
                pl.BlockSpec((tr, tc), lambda r, c: (r, c)),   # x tile
            ],
            out_specs=pl.BlockSpec((tr, tc), lambda r, c: (r, c)),
        ),
        compiler_params=pltpu.CompilerParams(
            dimension_semantics=("parallel", "parallel"),   # shard across v7x TCs
            vmem_limit_bytes=vmem_limit,
        ),
        cost_estimate=cost,
    )(g2, x2)

    return out.reshape(N, C, H, W)


# ---------------------------------------------------------------------------
# Self-test
# ---------------------------------------------------------------------------
if __name__ == "__main__":
    # Small shapes consistent with the module's forward
    # (production is x804: [1, 3840, 7, 7], x808: [1, 3840, 1, 1]).
    N, C, H, W = 2, 96, 7, 7
    key = jax.random.PRNGKey(0)
    k1, k2 = jax.random.split(key)

    # f32 path
    x804 = jax.random.normal(k1, (N, C, H, W), dtype=jnp.float32)
    x808 = jax.random.normal(k2, (N, C, 1, 1), dtype=jnp.float32)
    out = jax.block_until_ready(sigmoid_mul(x804, x808))
    ref = x804 * jax.nn.sigmoid(x808)
    assert out.shape == (N, C, H, W)
    assert jnp.allclose(out, ref, atol=1e-6, rtol=1e-6), "f32 mismatch vs reference"

    # bf16 path (bf16 in HBM, f32 compute in-kernel, 16-row sublane packing)
    x_bf = x804.astype(jnp.bfloat16)
    g_bf = x808.astype(jnp.bfloat16)
    out_bf = jax.block_until_ready(sigmoid_mul(x_bf, g_bf))
    ref_bf = (x_bf.astype(jnp.float32) * jax.nn.sigmoid(g_bf.astype(jnp.float32))
              ).astype(jnp.bfloat16)
    assert out_bf.dtype == jnp.bfloat16
    assert jnp.allclose(out_bf.astype(jnp.float32), ref_bf.astype(jnp.float32),
                        atol=1e-2, rtol=2e-2), "bf16 mismatch vs reference"

    print("KERNEL_OK")
</pallas_src>

<mosaic_0001>
module attributes {stable_mosaic.version = 11 : i64} {
  func.func @_sigmoid_mul_kernel(%arg0: i32, %arg1: i32, %arg2: memref<96x1xf32, #tpu.memory_space<vmem>>, %arg3: memref<96x49xf32, #tpu.memory_space<vmem>>, %arg4: memref<96x49xf32, #tpu.memory_space<vmem>>) attributes {dimension_semantics = [#tpu.dimension_semantics<parallel>, #tpu.dimension_semantics<parallel>], iteration_bounds = array<i64: 2, 1>, scalar_prefetch = 0 : i64, scratch_operands = 0 : i64, tpu.core_type = #tpu.core_type<tc>, window_params = [{transform_indices = @transform_0, window_bounds = array<i64: 96, 1>}, {transform_indices = @transform_1, window_bounds = array<i64: 96, 49>}, {transform_indices = @transform_2, window_bounds = array<i64: 96, 49>}]} {
    %c0 = arith.constant 0 : index
    %c0_0 = arith.constant 0 : index
    %0 = vector.load %arg2[%c0, %c0_0] : memref<96x1xf32, #tpu.memory_space<vmem>>, vector<96x1xf32>
    %1 = arith.negf %0 : vector<96x1xf32>
    %2 = math.exp %1 : vector<96x1xf32>
    %cst = arith.constant 1.000000e+00 : f32
    %3 = vector.broadcast %cst : f32 to vector<96x1xf32>
    %4 = arith.addf %3, %2 : vector<96x1xf32>
    %5 = arith.divf %3, %4 : vector<96x1xf32>
    %c0_1 = arith.constant 0 : index
    %c0_2 = arith.constant 0 : index
    %6 = vector.load %arg3[%c0_1, %c0_2] : memref<96x49xf32, #tpu.memory_space<vmem>>, vector<96x49xf32>
    %7 = vector.broadcast %5 : vector<96x1xf32> to vector<96x49xf32>
    %8 = arith.mulf %6, %7 : vector<96x49xf32>
    %c0_3 = arith.constant 0 : index
    %c0_4 = arith.constant 0 : index
    %9 = vector.load %arg4[%c0_3, %c0_4] : memref<96x49xf32, #tpu.memory_space<vmem>>, vector<96x49xf32>
    tpu.vector_store %arg4[%c0_3, %c0_4], %8 {strides = array<i32>} : memref<96x49xf32, #tpu.memory_space<vmem>>, vector<96x49xf32>,
    return
  }
  func.func @transform_0(%arg0: i32, %arg1: i32) -> (i32, i32) {
    %c0_i32 = arith.constant 0 : i32
    %c0_i32_0 = arith.constant 0 : i32
    return %arg0, %c0_i32 : i32, i32
  }
  func.func @transform_1(%arg0: i32, %arg1: i32) -> (i32, i32) {
    %c0_i32 = arith.constant 0 : i32
    return %arg0, %arg1 : i32, i32
  }
  func.func @transform_2(%arg0: i32, %arg1: i32) -> (i32, i32) {
    %c0_i32 = arith.constant 0 : i32
    return %arg0, %arg1 : i32, i32
  }
}

</mosaic_0001>

<llo_original>
// kernel: tpu_custom_call.1
$region0: #{tpu_custom_call.1}
  #allocation0 [shape = 'u32[]', space=smem, size = 0x4, offset = 0x4, fixed_abs, tag = 'smem constant byte address 0x4 - core index']
  #allocation1 [shape = 'u32[144,128]{1,0:T(1,128)}', space=vmem, size = 0x12000, scoped, tag = 'internal scratch']
  %s0 = inlined_call_operand.vmem [shape: f32[192,1], index: 0, kind: input, shape index: {}]
  %s1 = inlined_call_operand.vmem [shape: f32[192,49], index: 1, kind: input, shape index: {}]
  %s2 = inlined_call_operand.vmem [shape: f32[192,49], index: 2, kind: output, shape index: {}]
  %s3 = sld [smem:[#allocation0]]
  $region41: #{tpu_custom_call.1} parent=0
    _
  %s5 = ssub.s32 1, %s3
  %s6 = scalar_select 0, %s5, %s3
  loop: start=0, step=1, limit=4
  $region2: #{tpu_custom_call.1} parent=0 // loop_pre_header
    _
  $region3: #{tpu_custom_call.1} parent=0 // loop_header
    %s8 = sphi 0, %s12
    %p9 = scmp.ge.s32.totalorder %s8, 4
    %s15 = sphi 0, %s27
    %s16 = sphi 0, %s23
    %s17 = sphi 0, %s15
    %s18 = sphi 0, %s16
    %s19 = sphi 0, %s17
    %s20 = sphi 0, %s18
    %s30 = sphi 0, %s32
    %s33 = sphi 0, %s30
    %s34 = sphi 0, %s33
    %s50 = sphi 0, %s34
    %s58 = sphi 0, %s60
    %s61 = sphi 0, %s58
    %s62 = sphi 0, %s61
    %s78 = sphi 0, %s62
    %s86 = sphi 0, %s88
    %s89 = sphi 0, %s86
    %s90 = sphi 0, %s89
    %s106 = sphi 0, %s90
  $region4: #{tpu_custom_call.1} parent=0 // loop_header_branch
    %11 = sbr.rel (%p9) target = $region8
  $region5: #{tpu_custom_call.1} parent=0 // loop_body
    %s13 = ssub.s32 %s8, 1
    %s14 = ssub.s32 %s8, 2
    %s21 = sadd.s32 1, %s16
    %p22 = scmp.ge.s32.totalorder %s21, 1
    %s23 = scalar_select %p22, 0, %s21
    %s24 = sadd.s32 1, %s15
    %s25 = scalar_select %p22, %s24, %s15
    %p26 = scmp.ge.s32.totalorder %s25, 2
    %s27 = scalar_select %p26, 0, %s25
    %s28 = ssub.s32 %s15, %s27
    %p29 = scmp.eq.s32.totalorder %s28, 0
    %s31 = sadd.s32 %s30, 1
    %s32 = scalar_select %p29, %s30, %s31
    %p35 = pneg %p29
    %p36 = scmp.eq.s32.totalorder %s8, 1
    %p37 = por %p35, %p36
    %p38 = scmp.ne.s32.totalorder %s30, %s33
    %p39 = scmp.eq.s32.totalorder %s8, 0
    %p40 = por %p38, %p39
    %p41 = scmp.ne.s32.totalorder %s30, %s33
    %p42 = scmp.eq.s32.totalorder %s13, 1
    %p43 = por %p41, %p42
    %p44 = scmp.ne.s32.totalorder %s33, %s34
    %p45 = scmp.eq.s32.totalorder %s13, 0
    %p46 = por %p44, %p45
    %p47 = scmp.ne.s32.totalorder %s33, %s34
    %p48 = scmp.eq.s32.totalorder %s14, 1
    %p49 = por %p47, %p48
    %p51 = scmp.ne.s32.totalorder %s34, %s50
    %p52 = scmp.eq.s32.totalorder %s14, 0
    %p53 = por %p51, %p52
    %s54 = ssub.s32 %s15, %s27
    %s55 = ssub.s32 %s16, %s23
    %s56 = sor.u32 %s54, %s55
    %p57 = scmp.eq.s32.totalorder %s56, 0
    %s59 = sadd.s32 %s58, 1
    %s60 = scalar_select %p57, %s58, %s59
    %p63 = pneg %p57
    %p64 = scmp.eq.s32.totalorder %s8, 1
    %p65 = por %p63, %p64
    %p66 = scmp.ne.s32.totalorder %s58, %s61
    %p67 = scmp.eq.s32.totalorder %s8, 0
    %p68 = por %p66, %p67
    %p69 = scmp.ne.s32.totalorder %s58, %s61
    %p70 = scmp.eq.s32.totalorder %s13, 1
    %p71 = por %p69, %p70
    %p72 = scmp.ne.s32.totalorder %s61, %s62
    %p73 = scmp.eq.s32.totalorder %s13, 0
    %p74 = por %p72, %p73
    %p75 = scmp.ne.s32.totalorder %s61, %s62
    %p76 = scmp.eq.s32.totalorder %s14, 1
    %p77 = por %p75, %p76
    %p79 = scmp.ne.s32.totalorder %s62, %s78
    %p80 = scmp.eq.s32.totalorder %s14, 0
    %p81 = por %p79, %p80
    %s82 = ssub.s32 %s15, %s27
    %s83 = ssub.s32 %s16, %s23
    %s84 = sor.u32 %s82, %s83
    %p85 = scmp.eq.s32.totalorder %s84, 0
    %s87 = sadd.s32 %s86, 1
    %s88 = scalar_select %p85, %s86, %s87
    %p91 = pneg %p85
    %p92 = scmp.eq.s32.totalorder %s8, 1
    %p93 = por %p91, %p92
    %p94 = scmp.ne.s32.totalorder %s86, %s89
    %p95 = scmp.eq.s32.totalorder %s8, 0
    %p96 = por %p94, %p95
    %p97 = scmp.ne.s32.totalorder %s86, %s89
    %p98 = scmp.eq.s32.totalorder %s13, 1
    %p99 = por %p97, %p98
    %p100 = scmp.ne.s32.totalorder %s89, %s90
    %p101 = scmp.eq.s32.totalorder %s13, 0
    %p102 = por %p100, %p101
    %p103 = scmp.ne.s32.totalorder %s89, %s90
    %p104 = scmp.eq.s32.totalorder %s14, 1
    %p105 = por %p103, %p104
    %p107 = scmp.ne.s32.totalorder %s90, %s106
    %p108 = scmp.eq.s32.totalorder %s14, 0
    %p109 = por %p107, %p108
    %p110 = scmp.le.s32.totalorder 1, %s8
    %p111 = scmp.lt.s32.totalorder %s8, 3
    %p112 = pnand %p110, %p111
    %p113 = pneg %p112
    // Predicated region
    $region9: #{tpu_custom_call.1} parent=5 // pred_check
      _
    $region10: #{tpu_custom_call.1} parent=5 // pred_check_branch
      %115 = sbr.rel (%p112) target = $region12
    $region11: #{tpu_custom_call.1} parent=5 // pred_region
      %s116 = ssub.s32 %s8, 1
    $region12: #{tpu_custom_call.1} parent=5 // pred_fallthru
      _
    %p117 = scmp.lt.s32.totalorder %s8, 2
    // Predicated region
    $region13: #{tpu_custom_call.1} parent=5 // pred_check
      %p118 = pneg %p117
    $region14: #{tpu_custom_call.1} parent=5 // pred_check_branch
      %120 = sbr.rel (%p118) target = $region16
    $region15: #{tpu_custom_call.1} parent=5 // pred_region
      // Predicated region
      $region17: #{tpu_custom_call.1} parent=15 // pred_check
        %p121 = pneg %p40
      $region18: #{tpu_custom_call.1} parent=15 // pred_check_branch
        %123 = sbr.rel (%p121) target = $region20
      $region19: #{tpu_custom_call.1} parent=15 // pred_region
        %s124 = smul.u32 12, %s15
        %p125 = scmp.lt.s32.totalorder %s124, 23
        %s126 = scalar_select %p125, %s124, 23
        %s127 = smul.addr %s126, 8
        %s128 = scalar_lea.vmem %s0, %s127
        %s129 = smul.u32 12, %s15
      $region20: #{tpu_custom_call.1} parent=15 // pred_fallthru
        _
      // Predicated region
      $region21: #{tpu_custom_call.1} parent=15 // pred_check
        %p130 = pneg %p68
      $region22: #{tpu_custom_call.1} parent=15 // pred_check_branch
        %132 = sbr.rel (%p130) target = $region24
      $region23: #{tpu_custom_call.1} parent=15 // pred_region
        %s133 = smul.u32 12, %s15
        %p134 = scmp.lt.s32.totalorder %s133, 23
        %s135 = scalar_select %p134, %s133, 23
        %p136 = scmp.lt.s32.totalorder %s16, 0
        %s137 = scalar_select %p136, %s16, 0
        %s138 = sadd.s32 %s137, %s135
        %s139 = smul.addr %s138, 8
        %s140 = scalar_lea.vmem %s1, %s139
        %s141 = smul.u32 12, %s15
      $region24: #{tpu_custom_call.1} parent=15 // pred_fallthru
        _
    $region16: #{tpu_custom_call.1} parent=5 // pred_fallthru
      _
    %p142 = scmp.le.s32.totalorder 1, %s8
    %p143 = scmp.lt.s32.totalorder %s8, 3
    %p144 = pnand %p142, %p143
    %p145 = pneg %p144
    // Predicated region
    $region25: #{tpu_custom_call.1} parent=5 // pred_check
      _
    $region26: #{tpu_custom_call.1} parent=5 // pred_check_branch
      %147 = sbr.rel (%p144) target = $region28
    $region27: #{tpu_custom_call.1} parent=5 // pred_region
      %s148 = ssub.s32 %s8, 1
      %s149 = smul.u32 12, %s17
      %p150 = scmp.lt.s32.totalorder %s149, 23
      %s151 = scalar_select %p150, %s149, 23
      %s152 = smul.addr %s151, 8
      %s153 = scalar_lea.vmem %s0, %s152
      %p154 = pneg %p46
      %p155 = pneg %p43
      %s156 = smul.u32 12, %s17
      %p157 = scmp.lt.s32.totalorder %s156, 23
      %s158 = scalar_select %p157, %s156, 23
      %p159 = scmp.lt.s32.totalorder %s18, 0
      %s160 = scalar_select %p159, %s18, 0
      %s161 = sadd.s32 %s160, %s158
      %s162 = smul.addr %s161, 8
      %s163 = scalar_lea.vmem %s1, %s162
      %p164 = pneg %p74
      %p165 = pneg %p71
      %p166 = pneg %p102
      %p167 = pneg %p99
      %s168 = smul.u32 12, %s17
      %p169 = scmp.lt.s32.totalorder %s168, 23
      %s170 = scalar_select %p169, %s168, 23
      %p171 = scmp.lt.s32.totalorder %s18, 0
      %s172 = scalar_select %p171, %s18, 0
      %s173 = sadd.s32 %s172, %s170
      %s174 = smul.addr %s173, 8
      %s175 = scalar_lea.vmem %s2, %s174
      %s176 = smul.u32 12, %s17
      %p177 = scmp.lt.s32.totalorder %s176, 23
      %s178 = scalar_select %p177, %s176, 23
      %s179 = smul.addr %s178, 8
      %s180 = scalar_lea.vmem %s0, %s179
      %s181 = smul.u32 12, %s17
      %s182 = smul.u32 12, %s17
      %p183 = scmp.lt.s32.totalorder %s182, 23
      %s184 = scalar_select %p183, %s182, 23
      %p185 = scmp.lt.s32.totalorder %s18, 0
      %s186 = scalar_select %p185, %s18, 0
      %s187 = sadd.s32 %s186, %s184
      %s188 = smul.addr %s187, 8
      %s189 = scalar_lea.vmem %s1, %s188
      %s190 = smul.u32 12, %s17
      %s191 = smul.u32 12, %s17
      %p192 = scmp.lt.s32.totalorder %s191, 23
      %s193 = scalar_select %p192, %s191, 23
      %p194 = scmp.lt.s32.totalorder %s18, 0
      %s195 = scalar_select %p194, %s18, 0
      %s196 = sadd.s32 %s195, %s193
      %s197 = smul.addr %s196, 8
      %s198 = scalar_lea.vmem %s2, %s197
      %s199 = smul.u32 12, %s17
      %v200 = vld [vmem:[%s180] sm:$0xff]
      %v201 = vld [vmem:[%s180 + $0x8] sm:$0xff]
      %v202 = vld [vmem:[%s180 + $0x10] sm:$0xff]
      %v203 = vld [vmem:[%s180 + $0x18] sm:$0xff]
      %v204 = vld [vmem:[%s180 + $0x20] sm:$0xff]
      %v205 = vld [vmem:[%s180 + $0x28] sm:$0xff]
      %v206 = vld [vmem:[%s180 + $0x30] sm:$0xff]
      %v207 = vld [vmem:[%s180 + $0x38] sm:$0xff]
      %v208 = vld [vmem:[%s180 + $0x40] sm:$0xff]
      %v209 = vld [vmem:[%s180 + $0x48] sm:$0xff]
      %v210 = vld [vmem:[%s180 + $0x50] sm:$0xff]
      %v211 = vld [vmem:[%s180 + $0x58] sm:$0xff]
      %v212 = vxor.u32 %v200, 2147483648
      %v213 = vxor.u32 %v201, 2147483648
      %v214 = vxor.u32 %v202, 2147483648
      %v215 = vxor.u32 %v203, 2147483648
      %v216 = vxor.u32 %v204, 2147483648
      %v217 = vxor.u32 %v205, 2147483648
      %v218 = vxor.u32 %v206, 2147483648
      %v219 = vxor.u32 %v207, 2147483648
      %v220 = vxor.u32 %v208, 2147483648
      %v221 = vxor.u32 %v209, 2147483648
      %v222 = vxor.u32 %v210, 2147483648
      %v223 = vxor.u32 %v211, 2147483648
      %v224 = vmul.f32 %v212, 1.442695
      %v225 = vpow.pop %v224
      %v226 = vmul.f32 %v213, 1.442695
      %v227 = vpow.pop %v226
      %v228 = vmul.f32 %v214, 1.442695
      %v229 = vpow.pop %v228
      %v230 = vmul.f32 %v215, 1.442695
      %v231 = vpow.pop %v230
      %v232 = vmul.f32 %v216, 1.442695
      %v233 = vpow.pop %v232
      %v234 = vmul.f32 %v217, 1.442695
      %v235 = vpow.pop %v234
      %v236 = vmul.f32 %v218, 1.442695
      %v237 = vpow.pop %v236
      %v238 = vmul.f32 %v219, 1.442695
      %v239 = vpow.pop %v238
      %v240 = vmul.f32 %v220, 1.442695
      %v241 = vpow.pop %v240
      %v242 = vmul.f32 %v221, 1.442695
      %v243 = vpow.pop %v242
      %v244 = vmul.f32 %v222, 1.442695
      %v245 = vpow.pop %v244
      %v246 = vmul.f32 %v223, 1.442695
      %v247 = vpow.pop %v246
      %v248 = vadd.f32 %v225, 1.0
      %v249 = vadd.f32 %v227, 1.0
      %v250 = vadd.f32 %v229, 1.0
      %v251 = vadd.f32 %v231, 1.0
      %v252 = vadd.f32 %v233, 1.0
      %v253 = vadd.f32 %v235, 1.0
      %v254 = vadd.f32 %v237, 1.0
      %v255 = vadd.f32 %v239, 1.0
      %v256 = vadd.f32 %v241, 1.0
      %v257 = vadd.f32 %v243, 1.0
      %v258 = vadd.f32 %v245, 1.0
      %v259 = vadd.f32 %v247, 1.0
      %v260 = vrcp.pop %v248
      %v261 = vmul.f32 1.0, %v260
      %v262 = vrcp.pop %v249
      %v263 = vmul.f32 1.0, %v262
      %v264 = vrcp.pop %v250
      %v265 = vmul.f32 1.0, %v264
      %v266 = vrcp.pop %v251
      %v267 = vmul.f32 1.0, %v266
      %v268 = vrcp.pop %v252
      %v269 = vmul.f32 1.0, %v268
      %v270 = vrcp.pop %v253
      %v271 = vmul.f32 1.0, %v270
      %v272 = vrcp.pop %v254
      %v273 = vmul.f32 1.0, %v272
      %v274 = vrcp.pop %v255
      %v275 = vmul.f32 1.0, %v274
      %v276 = vrcp.pop %v256
      %v277 = vmul.f32 1.0, %v276
      %v278 = vrcp.pop %v257
      %v279 = vmul.f32 1.0, %v278
      %v280 = vrcp.pop %v258
      %v281 = vmul.f32 1.0, %v280
      %v282 = vrcp.pop %v259
      %v283 = vmul.f32 1.0, %v282
      %v284 = vld [vmem:[%s189] sm:$0xff]
      %v285 = vld [vmem:[%s189 + $0x8] sm:$0xff]
      %v286 = vld [vmem:[%s189 + $0x10] sm:$0xff]
      %v287 = vld [vmem:[%s189 + $0x18] sm:$0xff]
      %v288 = vld [vmem:[%s189 + $0x20] sm:$0xff]
      %v289 = vld [vmem:[%s189 + $0x28] sm:$0xff]
      %v290 = vld [vmem:[%s189 + $0x30] sm:$0xff]
      %v291 = vld [vmem:[%s189 + $0x38] sm:$0xff]
      %v292 = vld [vmem:[%s189 + $0x40] sm:$0xff]
      %v293 = vld [vmem:[%s189 + $0x48] sm:$0xff]
      %v294 = vld [vmem:[%s189 + $0x50] sm:$0xff]
      %v295 = vld [vmem:[%s189 + $0x58] sm:$0xff]
      %297 = vset.pattern.permute.xlu0 0
      %298 = vperm.xlu0 %297, %v261
      %v299 = vpop.permute.xlu0 %298
      %302 = vset.pattern.permute.xlu0 0
      %303 = vperm.xlu0 %302, %v263
      %v304 = vpop.permute.xlu0 %303
      %307 = vset.pattern.permute.xlu0 0
      %308 = vperm.xlu0 %307, %v265
      %v309 = vpop.permute.xlu0 %308
      %312 = vset.pattern.permute.xlu0 0
      %313 = vperm.xlu0 %312, %v267
      %v314 = vpop.permute.xlu0 %313
      %317 = vset.pattern.permute.xlu0 0
      %318 = vperm.xlu0 %317, %v269
      %v319 = vpop.permute.xlu0 %318
      %322 = vset.pattern.permute.xlu0 0
      %323 = vperm.xlu0 %322, %v271
      %v324 = vpop.permute.xlu0 %323
      %327 = vset.pattern.permute.xlu0 0
      %328 = vperm.xlu0 %327, %v273
      %v329 = vpop.permute.xlu0 %328
      %332 = vset.pattern.permute.xlu0 0
      %333 = vperm.xlu0 %332, %v275
      %v334 = vpop.permute.xlu0 %333
      %337 = vset.pattern.permute.xlu0 0
      %338 = vperm.xlu0 %337, %v277
      %v339 = vpop.permute.xlu0 %338
      %342 = vset.pattern.permute.xlu0 0
      %343 = vperm.xlu0 %342, %v279
      %v344 = vpop.permute.xlu0 %343
      %347 = vset.pattern.permute.xlu0 0
      %348 = vperm.xlu0 %347, %v281
      %v349 = vpop.permute.xlu0 %348
      %352 = vset.pattern.permute.xlu0 0
      %353 = vperm.xlu0 %352, %v283
      %v354 = vpop.permute.xlu0 %353
      %v356 = vmul.f32 %v284, %v299
      %v357 = vmul.f32 %v285, %v304
      %v358 = vmul.f32 %v286, %v309
      %v359 = vmul.f32 %v287, %v314
      %v360 = vmul.f32 %v288, %v319
      %v361 = vmul.f32 %v289, %v324
      %v362 = vmul.f32 %v290, %v329
      %v363 = vmul.f32 %v291, %v334
      %v364 = vmul.f32 %v292, %v339
      %v365 = vmul.f32 %v293, %v344
      %v366 = vmul.f32 %v294, %v349
      %v367 = vmul.f32 %v295, %v354
      %vm368 = vcmask 400384
      %369 = vst.msk [vmem:[%s198] sm:$0xff] %vm368, %v356
      %370 = vst.msk [vmem:[%s198 + $0x8] sm:$0xff] %vm368, %v357
      %371 = vst.msk [vmem:[%s198 + $0x10] sm:$0xff] %vm368, %v358
      %372 = vst.msk [vmem:[%s198 + $0x18] sm:$0xff] %vm368, %v359
      %373 = vst.msk [vmem:[%s198 + $0x20] sm:$0xff] %vm368, %v360
      %374 = vst.msk [vmem:[%s198 + $0x28] sm:$0xff] %vm368, %v361
      %375 = vst.msk [vmem:[%s198 + $0x30] sm:$0xff] %vm368, %v362
      %376 = vst.msk [vmem:[%s198 + $0x38] sm:$0xff] %vm368, %v363
      %377 = vst.msk [vmem:[%s198 + $0x40] sm:$0xff] %vm368, %v364
      %378 = vst.msk [vmem:[%s198 + $0x48] sm:$0xff] %vm368, %v365
      %379 = vst.msk [vmem:[%s198 + $0x50] sm:$0xff] %vm368, %v366
      %380 = vst.msk [vmem:[%s198 + $0x58] sm:$0xff] %vm368, %v367
      %s381 = smul.u32 12, %s17
      %p382 = scmp.lt.s32.totalorder %s381, 23
      %s383 = scalar_select %p382, %s381, 23
      %p384 = scmp.lt.s32.totalorder %s18, 0
      %s385 = scalar_select %p384, %s18, 0
      %s386 = sadd.s32 %s385, %s383
      %s387 = smul.addr %s386, 8
      %s388 = scalar_lea.vmem %s2, %s387
      // Predicated region
      $region29: #{tpu_custom_call.1} parent=27 // pred_check
        %p389 = pneg %p99
      $region30: #{tpu_custom_call.1} parent=27 // pred_check_branch
        %391 = sbr.rel (%p389) target = $region32
      $region31: #{tpu_custom_call.1} parent=27 // pred_region
        %s392 = smul.u32 12, %s17
      $region32: #{tpu_custom_call.1} parent=27 // pred_fallthru
        _
    $region28: #{tpu_custom_call.1} parent=5 // pred_fallthru
      _
    %p393 = scmp.le.s32.totalorder 2, %s8
    // Predicated region
    $region33: #{tpu_custom_call.1} parent=5 // pred_check
      %p394 = pneg %p393
    $region34: #{tpu_custom_call.1} parent=5 // pred_check_branch
      %396 = sbr.rel (%p394) target = $region36
    $region35: #{tpu_custom_call.1} parent=5 // pred_region
      %s397 = ssub.s32 %s8, 2
      // Predicated region
      $region37: #{tpu_custom_call.1} parent=35 // pred_check
        %p398 = pneg %p105
      $region38: #{tpu_custom_call.1} parent=35 // pred_check_branch
        %400 = sbr.rel (%p398) target = $region40
      $region39: #{tpu_custom_call.1} parent=35 // pred_region
        %s401 = smul.u32 12, %s19
        %p402 = scmp.lt.s32.totalorder %s401, 23
        %s403 = scalar_select %p402, %s401, 23
        %p404 = scmp.lt.s32.totalorder %s20, 0
        %s405 = scalar_select %p404, %s20, 0
        %s406 = sadd.s32 %s405, %s403
        %s407 = smul.addr %s406, 8
        %s408 = scalar_lea.vmem %s2, %s407
      $region40: #{tpu_custom_call.1} parent=35 // pred_fallthru
        _
    $region36: #{tpu_custom_call.1} parent=5 // pred_fallthru
      _
  $region6: #{tpu_custom_call.1} parent=0 // loop_footer
    %s12 = sadd.s32 1, %s8
  $region7: #{tpu_custom_call.1} parent=0 // loop_footer_branch
    %7 = sbr.rel target = $region3
  $region8: #{tpu_custom_call.1} parent=0 // loop_exit
    _

</llo_original>
